<compile_context>
chip_gen: v5e
topology: v5e:2x2
jax: 0.10.0
libtpu: 0.0.40
codegen_flags: <defaults>
</compile_context>

<pallas_src>
import functools

import jax
import jax.numpy as jnp
from jax.experimental import pallas as pl
from jax.experimental.pallas import tpu as pltpu


def _round_up(x: int, m: int) -> int:
    return ((x + m - 1) // m) * m


def _cosine_sim_kernel(x1_ref, x2_ref, o_ref):
    x1 = x1_ref[...]                      # [TM, D], input dtype
    x2 = x2_ref[...]                      # [TN, D], input dtype

    # x1 @ x2.T expressed as a direct contraction over D (no transposed copy),
    # f32 accumulation on the MXU.
    dots = jax.lax.dot_general(
        x1, x2,
        dimension_numbers=(((1,), (1,)), ((), ())),
        preferred_element_type=jnp.float32,
    )                                     # [TM, TN] f32

    # Inverse row norms in f32 via rsqrt (EUP slot, effectively free).
    x1f = x1.astype(jnp.float32)
    x2f = x2.astype(jnp.float32)
    inv_n1 = jax.lax.rsqrt(jnp.sum(x1f * x1f, axis=1, keepdims=True))  # [TM, 1]
    inv_n2 = jax.lax.rsqrt(jnp.sum(x2f * x2f, axis=1, keepdims=True))  # [TN, 1]

    # Two broadcast multiplies instead of a materialized MxN denom + divide.
    o_ref[...] = ((dots * inv_n1) * inv_n2.T).astype(o_ref.dtype)


@functools.partial(jax.jit, static_argnames=("block_m", "block_n"))
def cosine_similarity_fast(x1, x2, *, block_m: int = 256, block_n: int = 256):
    """Pallas equivalent of CosineSimilarityFast.forward(x1, x2)."""
    M, D = x1.shape
    N, D2 = x2.shape
    assert D == D2, "x1 and x2 must share the feature dimension"

    out_dtype = jnp.result_type(x1.dtype, x2.dtype)

    # Tile sizes: cap at block_m/block_n, but never bigger than the (aligned)
    # problem so tiny problems stay a single block.
    tm = min(block_m, _round_up(M, 8))
    tn = min(block_n, _round_up(N, 128))
    m_pad = _round_up(M, tm)
    n_pad = _round_up(N, tn)
    d_pad = _round_up(D, 128)

    x1p = x1 if (m_pad == M and d_pad == D) else jnp.pad(
        x1, ((0, m_pad - M), (0, d_pad - D)))
    x2p = x2 if (n_pad == N and d_pad == D) else jnp.pad(
        x2, ((0, n_pad - N), (0, d_pad - D)))

    grid = (m_pad // tm, n_pad // tn)

    out = pl.pallas_call(
        _cosine_sim_kernel,
        out_shape=jax.ShapeDtypeStruct((m_pad, n_pad), out_dtype),
        grid_spec=pl.GridSpec(
            grid=grid,
            in_specs=[
                # x1 block is constant across the inner (j) axis -> no re-fetch.
                pl.BlockSpec((tm, d_pad), lambda i, j: (i, 0)),
                pl.BlockSpec((tn, d_pad), lambda i, j: (j, 0)),
            ],
            out_specs=pl.BlockSpec((tm, tn), lambda i, j: (i, j)),
        ),
        compiler_params=pltpu.CompilerParams(
            # Both axes independent -> shard across v7x's two TensorCores.
            dimension_semantics=("parallel", "parallel"),
        ),
    )(x1p, x2p)

    out = out[:M, :N]
    # torch.squeeze(final, dim=1): only removes dim 1 if it has size 1.
    if out.shape[1] == 1:
        out = jnp.squeeze(out, axis=1)
    return out


def _reference(x1, x2):
    x1 = x1.astype(jnp.float32)
    x2 = x2.astype(jnp.float32)
    dots = x1 @ x2.T
    n1 = jnp.linalg.norm(x1, axis=1, keepdims=True)
    n2 = jnp.linalg.norm(x2, axis=1, keepdims=True)
    ref = dots / (n1 * n2.T)
    if ref.shape[1] == 1:
        ref = jnp.squeeze(ref, axis=1)
    return ref


if __name__ == "__main__":
    key = jax.random.PRNGKey(0)
    k1, k2, k3 = jax.random.split(key, 3)

    # Small shapes consistent with the module; non-multiples of (8, 128)
    # exercise the padding / multi-tile path (grid = (1, 2) here).
    M, N, D = 200, 300, 96
    x1 = jax.random.normal(k1, (M, D), dtype=jnp.float32)
    x2 = jax.random.normal(k2, (N, D), dtype=jnp.float32)

    out = cosine_similarity_fast(x1, x2)
    out = jax.block_until_ready(out)

    ref = _reference(x1, x2)
    assert out.shape == (M, N)
    assert jnp.allclose(out, ref, atol=2e-5, rtol=2e-5), (
        float(jnp.max(jnp.abs(out - ref))))

    # N == 1 path: squeeze(dim=1) must remove the singleton column.
    x2_single = jax.random.normal(k3, (1, D), dtype=jnp.float32)
    out_single = jax.block_until_ready(cosine_similarity_fast(x1, x2_single))
    ref_single = _reference(x1, x2_single)
    assert out_single.shape == (M,)
    assert jnp.allclose(out_single, ref_single, atol=2e-5, rtol=2e-5)

    print("KERNEL_OK")
</pallas_src>

<mosaic_0001>
module attributes {stable_mosaic.version = 11 : i64} {
  func.func @_cosine_sim_kernel(%arg0: i32, %arg1: i32, %arg2: memref<200x128xf32, #tpu.memory_space<vmem>>, %arg3: memref<256x128xf32, #tpu.memory_space<vmem>>, %arg4: memref<200x256xf32, #tpu.memory_space<vmem>>) attributes {dimension_semantics = [#tpu.dimension_semantics<parallel>, #tpu.dimension_semantics<parallel>], iteration_bounds = array<i64: 1, 2>, scalar_prefetch = 0 : i64, scratch_operands = 0 : i64, tpu.core_type = #tpu.core_type<tc>, window_params = [{transform_indices = @transform_0, window_bounds = array<i64: 200, 128>}, {transform_indices = @transform_1, window_bounds = array<i64: 256, 128>}, {transform_indices = @transform_2, window_bounds = array<i64: 200, 256>}]} {
    %c0 = arith.constant 0 : index
    %c0_0 = arith.constant 0 : index
    %0 = vector.load %arg2[%c0, %c0_0] : memref<200x128xf32, #tpu.memory_space<vmem>>, vector<200x128xf32>
    %c0_1 = arith.constant 0 : index
    %c0_2 = arith.constant 0 : index
    %1 = vector.load %arg3[%c0_1, %c0_2] : memref<256x128xf32, #tpu.memory_space<vmem>>, vector<256x128xf32>
    %cst = arith.constant dense<0.000000e+00> : vector<200x256xf32>
    %2 = tpu.matmul %0, %1, %cst {dimension_numbers = #tpu.dot_dimension_numbers<[1], [1], [0], [0], [0, 0, 1, 0], [], []>} : vector<200x128xf32>, vector<256x128xf32>, vector<200x256xf32> -> vector<200x256xf32>
    %3 = arith.mulf %0, %0 : vector<200x128xf32>
    %cst_3 = arith.constant dense<0.000000e+00> : vector<200xf32>
    %4 = vector.multi_reduction <add>, %3, %cst_3 [1] : vector<200x128xf32> to vector<200xf32>
    %5 = vector.shape_cast %4 : vector<200xf32> to vector<200x1xf32>
    %6 = math.rsqrt %5 : vector<200x1xf32>
    %7 = arith.mulf %1, %1 : vector<256x128xf32>
    %cst_4 = arith.constant dense<0.000000e+00> : vector<256xf32>
    %8 = vector.multi_reduction <add>, %7, %cst_4 [1] : vector<256x128xf32> to vector<256xf32>
    %9 = vector.shape_cast %8 : vector<256xf32> to vector<256x1xf32>
    %10 = math.rsqrt %9 : vector<256x1xf32>
    %11 = vector.broadcast %6 : vector<200x1xf32> to vector<200x256xf32>
    %12 = arith.mulf %2, %11 : vector<200x256xf32>
    %13 = tpu.transpose %10, [1, 0] : vector<256x1xf32> -> vector<1x256xf32>
    %14 = vector.broadcast %13 : vector<1x256xf32> to vector<200x256xf32>
    %15 = arith.mulf %12, %14 : vector<200x256xf32>
    %c0_5 = arith.constant 0 : index
    %c0_6 = arith.constant 0 : index
    %16 = vector.load %arg4[%c0_5, %c0_6] : memref<200x256xf32, #tpu.memory_space<vmem>>, vector<200x256xf32>
    tpu.vector_store %arg4[%c0_5, %c0_6], %15 {strides = array<i32>} : memref<200x256xf32, #tpu.memory_space<vmem>>, vector<200x256xf32>,
    return
  }
  func.func @transform_0(%arg0: i32, %arg1: i32) -> (i32, i32) {
    %c0_i32 = arith.constant 0 : i32
    %c0_i32_0 = arith.constant 0 : i32
    return %arg0, %c0_i32 : i32, i32
  }
  func.func @transform_1(%arg0: i32, %arg1: i32) -> (i32, i32) {
    %c0_i32 = arith.constant 0 : i32
    %c0_i32_0 = arith.constant 0 : i32
    return %arg1, %c0_i32 : i32, i32
  }
  func.func @transform_2(%arg0: i32, %arg1: i32) -> (i32, i32) {
    %c0_i32 = arith.constant 0 : i32
    return %arg0, %arg1 : i32, i32
  }
}

</mosaic_0001>

<llo_original>
// kernel: cosine_similarity_fast.1
$region0: #{cosine_similarity_fast.1}
  #allocation0 [shape = 'u32[]', space=smem, size = 0x4, offset = 0x4, fixed_abs, tag = 'smem constant byte address 0x4 - core index']
  #allocation1 [shape = 'u32[72,128]{1,0:T(1,128)}', space=vmem, size = 0x9000, scoped, tag = 'internal scratch']
  %s0 = inlined_call_operand.vmem [shape: f32[200,128], index: 0, kind: input, shape index: {}]
  %s1 = inlined_call_operand.vmem [shape: f32[512,128], index: 1, kind: input, shape index: {}]
  %s2 = inlined_call_operand.vmem [shape: f32[200,512], index: 2, kind: output, shape index: {}]
  %s3 = sld [smem:[#allocation0]]
  $region60: #{cosine_similarity_fast.1} parent=0
    _
  %s5 = ssub.s32 1, %s3
  %s6 = scalar_select 0, %s5, %s3
  $region1: #{cosine_similarity_fast.1} parent=0
    #allocation2 [shape = 'u8[409600]{0}', space=vmem, size = 0x64000, scoped, tag = 'output window, operand 0']
    loop: start=0, step=1, limit=4
    $region2: #{cosine_similarity_fast.1} parent=1 // loop_pre_header
      _
    $region3: #{cosine_similarity_fast.1} parent=1 // loop_header
      %s8 = sphi 0, %s12
      %p9 = scmp.ge.s32.totalorder %s8, 4
      %s15 = sphi 0, %s27
      %s16 = sphi 0, %s23
      %s17 = sphi 0, %s15
      %s18 = sphi 0, %s16
      %s19 = sphi 0, %s17
      %s20 = sphi 0, %s18
      %s30 = sphi 0, %s32
      %s33 = sphi 0, %s30
      %s34 = sphi 0, %s33
      %s50 = sphi 0, %s34
      %s56 = sphi 0, %s58
      %s59 = sphi 0, %s56
      %s60 = sphi 0, %s59
      %s76 = sphi 0, %s60
      %s84 = sphi 0, %s86
      %s87 = sphi 0, %s84
      %s88 = sphi 0, %s87
      %s104 = sphi 0, %s88
    $region4: #{cosine_similarity_fast.1} parent=1 // loop_header_branch
      %11 = sbr.rel (%p9) target = $region8
    $region5: #{cosine_similarity_fast.1} parent=1 // loop_body
      %s13 = ssub.s32 %s8, 1
      %s14 = ssub.s32 %s8, 2
      %s21 = sadd.s32 1, %s16
      %p22 = scmp.ge.s32.totalorder %s21, 2
      %s23 = scalar_select %p22, 0, %s21
      %s24 = sadd.s32 1, %s15
      %s25 = scalar_select %p22, %s24, %s15
      %p26 = scmp.ge.s32.totalorder %s25, 1
      %s27 = scalar_select %p26, 0, %s25
      %s28 = ssub.s32 %s15, %s27
      %p29 = scmp.eq.s32.totalorder %s28, 0
      %s31 = sadd.s32 %s30, 1
      %s32 = scalar_select %p29, %s30, %s31
      %p35 = pneg %p29
      %p36 = scmp.eq.s32.totalorder %s8, 1
      %p37 = por %p35, %p36
      %p38 = scmp.ne.s32.totalorder %s30, %s33
      %p39 = scmp.eq.s32.totalorder %s8, 0
      %p40 = por %p38, %p39
      %p41 = scmp.ne.s32.totalorder %s30, %s33
      %p42 = scmp.eq.s32.totalorder %s13, 1
      %p43 = por %p41, %p42
      %p44 = scmp.ne.s32.totalorder %s33, %s34
      %p45 = scmp.eq.s32.totalorder %s13, 0
      %p46 = por %p44, %p45
      %p47 = scmp.ne.s32.totalorder %s33, %s34
      %p48 = scmp.eq.s32.totalorder %s14, 1
      %p49 = por %p47, %p48
      %p51 = scmp.ne.s32.totalorder %s34, %s50
      %p52 = scmp.eq.s32.totalorder %s14, 0
      %p53 = por %p51, %p52
      %s54 = ssub.s32 %s16, %s23
      %p55 = scmp.eq.s32.totalorder %s54, 0
      %s57 = sadd.s32 %s56, 1
      %s58 = scalar_select %p55, %s56, %s57
      %p61 = pneg %p55
      %p62 = scmp.eq.s32.totalorder %s8, 1
      %p63 = por %p61, %p62
      %p64 = scmp.ne.s32.totalorder %s56, %s59
      %p65 = scmp.eq.s32.totalorder %s8, 0
      %p66 = por %p64, %p65
      %p67 = scmp.ne.s32.totalorder %s56, %s59
      %p68 = scmp.eq.s32.totalorder %s13, 1
      %p69 = por %p67, %p68
      %p70 = scmp.ne.s32.totalorder %s59, %s60
      %p71 = scmp.eq.s32.totalorder %s13, 0
      %p72 = por %p70, %p71
      %p73 = scmp.ne.s32.totalorder %s59, %s60
      %p74 = scmp.eq.s32.totalorder %s14, 1
      %p75 = por %p73, %p74
      %p77 = scmp.ne.s32.totalorder %s60, %s76
      %p78 = scmp.eq.s32.totalorder %s14, 0
      %p79 = por %p77, %p78
      %s80 = ssub.s32 %s15, %s27
      %s81 = ssub.s32 %s16, %s23
      %s82 = sor.u32 %s80, %s81
      %p83 = scmp.eq.s32.totalorder %s82, 0
      %s85 = sadd.s32 %s84, 1
      %s86 = scalar_select %p83, %s84, %s85
      %p89 = pneg %p83
      %p90 = scmp.eq.s32.totalorder %s8, 1
      %p91 = por %p89, %p90
      %p92 = scmp.ne.s32.totalorder %s84, %s87
      %p93 = scmp.eq.s32.totalorder %s8, 0
      %p94 = por %p92, %p93
      %p95 = scmp.ne.s32.totalorder %s84, %s87
      %p96 = scmp.eq.s32.totalorder %s13, 1
      %p97 = por %p95, %p96
      %p98 = scmp.ne.s32.totalorder %s87, %s88
      %p99 = scmp.eq.s32.totalorder %s13, 0
      %p100 = por %p98, %p99
      %p101 = scmp.ne.s32.totalorder %s87, %s88
      %p102 = scmp.eq.s32.totalorder %s14, 1
      %p103 = por %p101, %p102
      %p105 = scmp.ne.s32.totalorder %s88, %s104
      %p106 = scmp.eq.s32.totalorder %s14, 0
      %p107 = por %p105, %p106
      %p108 = scmp.le.s32.totalorder 1, %s8
      %p109 = scmp.lt.s32.totalorder %s8, 3
      %p110 = pnand %p108, %p109
      %p111 = pneg %p110
      // Predicated region
      $region9: #{cosine_similarity_fast.1} parent=5 // pred_check
        _
      $region10: #{cosine_similarity_fast.1} parent=5 // pred_check_branch
        %113 = sbr.rel (%p110) target = $region12
      $region11: #{cosine_similarity_fast.1} parent=5 // pred_region
        %s114 = ssub.s32 %s8, 1
        // Predicated region
        $region13: #{cosine_similarity_fast.1} parent=11 // pred_check
          %p115 = pneg %p46
        $region14: #{cosine_similarity_fast.1} parent=11 // pred_check_branch
          %117 = sbr.rel (%p115) target = $region16
        $region15: #{cosine_similarity_fast.1} parent=11 // pred_region
          %s118 = smul.u32 25, %s17
          %p119 = scmp.lt.s32.totalorder %s118, 24
          %s120 = scalar_select %p119, %s118, 24
          %s121 = smul.addr %s120, 8
          %s122 = scalar_lea.vmem %s0, %s121
          %s123 = smul.u32 25, %s17
        $region16: #{cosine_similarity_fast.1} parent=11 // pred_fallthru
          _
      $region12: #{cosine_similarity_fast.1} parent=5 // pred_fallthru
        _
      %p124 = scmp.lt.s32.totalorder %s8, 2
      // Predicated region
      $region17: #{cosine_similarity_fast.1} parent=5 // pred_check
        %p125 = pneg %p124
      $region18: #{cosine_similarity_fast.1} parent=5 // pred_check_branch
        %127 = sbr.rel (%p125) target = $region20
      $region19: #{cosine_similarity_fast.1} parent=5 // pred_region
        // Predicated region
        $region21: #{cosine_similarity_fast.1} parent=19 // pred_check
          %p128 = pneg %p66
        $region22: #{cosine_similarity_fast.1} parent=19 // pred_check_branch
          %130 = sbr.rel (%p128) target = $region24
        $region23: #{cosine_similarity_fast.1} parent=19 // pred_region
          %s131 = smul.u32 32, %s16
          %p132 = scmp.lt.s32.totalorder %s131, 63
          %s133 = scalar_select %p132, %s131, 63
          %s134 = smul.addr %s133, 8
          %s135 = scalar_lea.vmem %s1, %s134
          %s136 = smul.u32 32, %s16
        $region24: #{cosine_similarity_fast.1} parent=19 // pred_fallthru
          _
      $region20: #{cosine_similarity_fast.1} parent=5 // pred_fallthru
        _
      %p137 = scmp.le.s32.totalorder 1, %s8
      %p138 = scmp.lt.s32.totalorder %s8, 3
      %p139 = pnand %p137, %p138
      %p140 = pneg %p139
      // Predicated region
      $region25: #{cosine_similarity_fast.1} parent=5 // pred_check
        _
      $region26: #{cosine_similarity_fast.1} parent=5 // pred_check_branch
        %142 = sbr.rel (%p139) target = $region28
      $region27: #{cosine_similarity_fast.1} parent=5 // pred_region
        %s143 = ssub.s32 %s8, 1
        %s144 = smul.u32 25, %s17
        %p145 = scmp.lt.s32.totalorder %s144, 24
        %s146 = scalar_select %p145, %s144, 24
        %s147 = smul.addr %s146, 8
        %s148 = scalar_lea.vmem %s0, %s147
        %p149 = pneg %p46
        %p150 = pneg %p43
        %s151 = smul.u32 32, %s18
        %p152 = scmp.lt.s32.totalorder %s151, 63
        %s153 = scalar_select %p152, %s151, 63
        %s154 = smul.addr %s153, 8
        %s155 = scalar_lea.vmem %s1, %s154
        %p156 = pneg %p72
        %p157 = pneg %p69
        %p158 = pneg %p100
        %p159 = pneg %p97
        %s160 = sand.u32 %s87, 1
        %s161 = sand.u32 %s87, 1
        %s162 = smul.addr %s161, 400
        %s163 = scalar_lea.vmem [#allocation2], %s162
        %s164 = smul.u32 25, %s17
        %p165 = scmp.lt.s32.totalorder %s164, 24
        %s166 = scalar_select %p165, %s164, 24
        %s167 = smul.addr %s166, 8
        %s168 = scalar_lea.vmem %s0, %s167
        %s169 = smul.u32 25, %s17
        %s170 = smul.u32 32, %s18
        %p171 = scmp.lt.s32.totalorder %s170, 63
        %s172 = scalar_select %p171, %s170, 63
        %s173 = smul.addr %s172, 8
        %s174 = scalar_lea.vmem %s1, %s173
        %s175 = smul.u32 32, %s18
        %s176 = smul.u32 25, %s17
        %s177 = smul.u32 2, %s18
        %v178 = vld [vmem:[%s168] sm:$0xff]
        %v179 = vld [vmem:[%s168 + $0x8] sm:$0xff]
        %v180 = vld [vmem:[%s168 + $0x10] sm:$0xff]
        %v181 = vld [vmem:[%s168 + $0x18] sm:$0xff]
        %v182 = vld [vmem:[%s168 + $0x20] sm:$0xff]
        %v183 = vld [vmem:[%s168 + $0x28] sm:$0xff]
        %v184 = vld [vmem:[%s168 + $0x30] sm:$0xff]
        %v185 = vld [vmem:[%s168 + $0x38] sm:$0xff]
        %v186 = vld [vmem:[%s168 + $0x40] sm:$0xff]
        %v187 = vld [vmem:[%s168 + $0x48] sm:$0xff]
        %v188 = vld [vmem:[%s168 + $0x50] sm:$0xff]
        %v189 = vld [vmem:[%s168 + $0x58] sm:$0xff]
        %v190 = vld [vmem:[%s168 + $0x60] sm:$0xff]
        %v191 = vld [vmem:[%s168 + $0x68] sm:$0xff]
        %v192 = vld [vmem:[%s168 + $0x70] sm:$0xff]
        %v193 = vld [vmem:[%s168 + $0x78] sm:$0xff]
        %v194 = vld [vmem:[%s168 + $0x80] sm:$0xff]
        %v195 = vld [vmem:[%s168 + $0x88] sm:$0xff]
        %v196 = vld [vmem:[%s168 + $0x90] sm:$0xff]
        %v197 = vld [vmem:[%s168 + $0x98] sm:$0xff]
        %v198 = vld [vmem:[%s168 + $0xa0] sm:$0xff]
        %v199 = vld [vmem:[%s168 + $0xa8] sm:$0xff]
        %v200 = vld [vmem:[%s168 + $0xb0] sm:$0xff]
        %v201 = vld [vmem:[%s168 + $0xb8] sm:$0xff]
        %v202 = vld [vmem:[%s168 + $0xc0] sm:$0xff]
        %v203 = vld [vmem:[%s174] sm:$0xff]
        %v204 = vld [vmem:[%s174 + $0x8] sm:$0xff]
        %v205 = vld [vmem:[%s174 + $0x10] sm:$0xff]
        %v206 = vld [vmem:[%s174 + $0x18] sm:$0xff]
        %v207 = vld [vmem:[%s174 + $0x20] sm:$0xff]
        %v208 = vld [vmem:[%s174 + $0x28] sm:$0xff]
        %v209 = vld [vmem:[%s174 + $0x30] sm:$0xff]
        %v210 = vld [vmem:[%s174 + $0x38] sm:$0xff]
        %v211 = vld [vmem:[%s174 + $0x40] sm:$0xff]
        %v212 = vld [vmem:[%s174 + $0x48] sm:$0xff]
        %v213 = vld [vmem:[%s174 + $0x50] sm:$0xff]
        %v214 = vld [vmem:[%s174 + $0x58] sm:$0xff]
        %v215 = vld [vmem:[%s174 + $0x60] sm:$0xff]
        %v216 = vld [vmem:[%s174 + $0x68] sm:$0xff]
        %v217 = vld [vmem:[%s174 + $0x70] sm:$0xff]
        %v218 = vld [vmem:[%s174 + $0x78] sm:$0xff]
        %v219 = vld [vmem:[%s174 + $0x80] sm:$0xff]
        %v220 = vld [vmem:[%s174 + $0x88] sm:$0xff]
        %v221 = vld [vmem:[%s174 + $0x90] sm:$0xff]
        %v222 = vld [vmem:[%s174 + $0x98] sm:$0xff]
        %v223 = vld [vmem:[%s174 + $0xa0] sm:$0xff]
        %v224 = vld [vmem:[%s174 + $0xa8] sm:$0xff]
        %v225 = vld [vmem:[%s174 + $0xb0] sm:$0xff]
        %v226 = vld [vmem:[%s174 + $0xb8] sm:$0xff]
        %v227 = vld [vmem:[%s174 + $0xc0] sm:$0xff]
        %v228 = vld [vmem:[%s174 + $0xc8] sm:$0xff]
        %v229 = vld [vmem:[%s174 + $0xd0] sm:$0xff]
        %v230 = vld [vmem:[%s174 + $0xd8] sm:$0xff]
        %v231 = vld [vmem:[%s174 + $0xe0] sm:$0xff]
        %v232 = vld [vmem:[%s174 + $0xe8] sm:$0xff]
        %v233 = vld [vmem:[%s174 + $0xf0] sm:$0xff]
        %v234 = vld [vmem:[%s174 + $0xf8] sm:$0xff]
        %235 = vmatpush.xpose.msra.mxu0 %v218
        %236 = vmatpush.xpose.msra.mxu0 %v217
        %237 = vmatpush.xpose.msra.mxu0 %v216
        %238 = vmatpush.xpose.msra.mxu0 %v215
        %239 = vmatpush.xpose.msra.mxu0 %v214
        %240 = vmatpush.xpose.msra.mxu0 %v213
        %241 = vmatpush.xpose.msra.mxu0 %v212
        %242 = vmatpush.xpose.msra.mxu0 %v211
        %243 = vmatpush.xpose.msra.mxu0 %v210
        %244 = vmatpush.xpose.msra.mxu0 %v209
        %245 = vmatpush.xpose.msra.mxu0 %v208
        %246 = vmatpush.xpose.msra.mxu0 %v207
        %247 = vmatpush.xpose.msra.mxu0 %v206
        %248 = vmatpush.xpose.msra.mxu0 %v205
        %249 = vmatpush.xpose.msra.mxu0 %v204
        %250 = vmatpush.xpose.msra.mxu0 %v203
        %251 = vmatmul.f32.gmra.mxu0 %v178
        %v252 = vpop.f32.mrf.mxu0
        %v253 = vadd.f32 0.0, %v252
        %254 = vmatmul.f32.gmra.mxu0 %v179
        %v255 = vpop.f32.mrf.mxu0
        %v256 = vadd.f32 0.0, %v255
        %257 = vmatmul.f32.gmra.mxu0 %v180
        %v258 = vpop.f32.mrf.mxu0
        %v259 = vadd.f32 0.0, %v258
        %260 = vmatmul.f32.gmra.mxu0 %v181
        %v261 = vpop.f32.mrf.mxu0
        %v262 = vadd.f32 0.0, %v261
        %263 = vmatmul.f32.gmra.mxu0 %v182
        %v264 = vpop.f32.mrf.mxu0
        %v265 = vadd.f32 0.0, %v264
        %266 = vmatmul.f32.gmra.mxu0 %v183
        %v267 = vpop.f32.mrf.mxu0
        %v268 = vadd.f32 0.0, %v267
        %269 = vmatmul.f32.gmra.mxu0 %v184
        %v270 = vpop.f32.mrf.mxu0
        %v271 = vadd.f32 0.0, %v270
        %272 = vmatmul.f32.gmra.mxu0 %v185
        %v273 = vpop.f32.mrf.mxu0
        %v274 = vadd.f32 0.0, %v273
        %275 = vmatmul.f32.gmra.mxu0 %v186
        %v276 = vpop.f32.mrf.mxu0
        %v277 = vadd.f32 0.0, %v276
        %278 = vmatmul.f32.gmra.mxu0 %v187
        %v279 = vpop.f32.mrf.mxu0
        %v280 = vadd.f32 0.0, %v279
        %281 = vmatmul.f32.gmra.mxu0 %v188
        %v282 = vpop.f32.mrf.mxu0
        %v283 = vadd.f32 0.0, %v282
        %284 = vmatmul.f32.gmra.mxu0 %v189
        %v285 = vpop.f32.mrf.mxu0
        %v286 = vadd.f32 0.0, %v285
        %287 = vmatmul.f32.gmra.mxu0 %v190
        %v288 = vpop.f32.mrf.mxu0
        %v289 = vadd.f32 0.0, %v288
        %290 = vmatmul.f32.gmra.mxu0 %v191
        %v291 = vpop.f32.mrf.mxu0
        %v292 = vadd.f32 0.0, %v291
        %293 = vmatmul.f32.gmra.mxu0 %v192
        %v294 = vpop.f32.mrf.mxu0
        %v295 = vadd.f32 0.0, %v294
        %296 = vmatmul.f32.gmra.mxu0 %v193
        %v297 = vpop.f32.mrf.mxu0
        %v298 = vadd.f32 0.0, %v297
        %299 = vmatmul.f32.gmra.mxu0 %v194
        %v300 = vpop.f32.mrf.mxu0
        %v301 = vadd.f32 0.0, %v300
        %302 = vmatmul.f32.gmra.mxu0 %v195
        %v303 = vpop.f32.mrf.mxu0
        %v304 = vadd.f32 0.0, %v303
        %305 = vmatmul.f32.gmra.mxu0 %v196
        %v306 = vpop.f32.mrf.mxu0
        %v307 = vadd.f32 0.0, %v306
        %308 = vmatmul.f32.gmra.mxu0 %v197
        %v309 = vpop.f32.mrf.mxu0
        %v310 = vadd.f32 0.0, %v309
        %311 = vmatmul.f32.gmra.mxu0 %v198
        %v312 = vpop.f32.mrf.mxu0
        %v313 = vadd.f32 0.0, %v312
        %314 = vmatmul.f32.gmra.mxu0 %v199
        %v315 = vpop.f32.mrf.mxu0
        %v316 = vadd.f32 0.0, %v315
        %317 = vmatmul.f32.gmra.mxu0 %v200
        %v318 = vpop.f32.mrf.mxu0
        %v319 = vadd.f32 0.0, %v318
        %320 = vmatmul.f32.gmra.mxu0 %v201
        %v321 = vpop.f32.mrf.mxu0
        %v322 = vadd.f32 0.0, %v321
        %323 = vmatmul.f32.gmra.mxu0 %v202
        %v324 = vpop.f32.mrf.mxu0
        %v325 = vadd.f32 0.0, %v324
        %326 = vdwg.mxu0
        %327 = vmatpush.xpose.msra.mxu0 %v234
        %328 = vmatpush.xpose.msra.mxu0 %v233
        %329 = vmatpush.xpose.msra.mxu0 %v232
        %330 = vmatpush.xpose.msra.mxu0 %v231
        %331 = vmatpush.xpose.msra.mxu0 %v230
        %332 = vmatpush.xpose.msra.mxu0 %v229
        %333 = vmatpush.xpose.msra.mxu0 %v228
        %334 = vmatpush.xpose.msra.mxu0 %v227
        %335 = vmatpush.xpose.msra.mxu0 %v226
        %336 = vmatpush.xpose.msra.mxu0 %v225
        %337 = vmatpush.xpose.msra.mxu0 %v224
        %338 = vmatpush.xpose.msra.mxu0 %v223
        %339 = vmatpush.xpose.msra.mxu0 %v222
        %340 = vmatpush.xpose.msra.mxu0 %v221
        %341 = vmatpush.xpose.msra.mxu0 %v220
        %342 = vmatpush.xpose.msra.mxu0 %v219
        %343 = vmatmul.f32.gmra.mxu0 %v178
        %v344 = vpop.f32.mrf.mxu0
        %v345 = vadd.f32 0.0, %v344
        %346 = vmatmul.f32.gmra.mxu0 %v179
        %v347 = vpop.f32.mrf.mxu0
        %v348 = vadd.f32 0.0, %v347
        %349 = vmatmul.f32.gmra.mxu0 %v180
        %v350 = vpop.f32.mrf.mxu0
        %v351 = vadd.f32 0.0, %v350
        %352 = vmatmul.f32.gmra.mxu0 %v181
        %v353 = vpop.f32.mrf.mxu0
        %v354 = vadd.f32 0.0, %v353
        %355 = vmatmul.f32.gmra.mxu0 %v182
        %v356 = vpop.f32.mrf.mxu0
        %v357 = vadd.f32 0.0, %v356
        %358 = vmatmul.f32.gmra.mxu0 %v183
        %v359 = vpop.f32.mrf.mxu0
        %v360 = vadd.f32 0.0, %v359
        %361 = vmatmul.f32.gmra.mxu0 %v184
        %v362 = vpop.f32.mrf.mxu0
        %v363 = vadd.f32 0.0, %v362
        %364 = vmatmul.f32.gmra.mxu0 %v185
        %v365 = vpop.f32.mrf.mxu0
        %v366 = vadd.f32 0.0, %v365
        %367 = vmatmul.f32.gmra.mxu0 %v186
        %v368 = vpop.f32.mrf.mxu0
        %v369 = vadd.f32 0.0, %v368
        %370 = vmatmul.f32.gmra.mxu0 %v187
        %v371 = vpop.f32.mrf.mxu0
        %v372 = vadd.f32 0.0, %v371
        %373 = vmatmul.f32.gmra.mxu0 %v188
        %v374 = vpop.f32.mrf.mxu0
        %v375 = vadd.f32 0.0, %v374
        %376 = vmatmul.f32.gmra.mxu0 %v189
        %v377 = vpop.f32.mrf.mxu0
        %v378 = vadd.f32 0.0, %v377
        %379 = vmatmul.f32.gmra.mxu0 %v190
        %v380 = vpop.f32.mrf.mxu0
        %v381 = vadd.f32 0.0, %v380
        %382 = vmatmul.f32.gmra.mxu0 %v191
        %v383 = vpop.f32.mrf.mxu0
        %v384 = vadd.f32 0.0, %v383
        %385 = vmatmul.f32.gmra.mxu0 %v192
        %v386 = vpop.f32.mrf.mxu0
        %v387 = vadd.f32 0.0, %v386
        %388 = vmatmul.f32.gmra.mxu0 %v193
        %v389 = vpop.f32.mrf.mxu0
        %v390 = vadd.f32 0.0, %v389
        %391 = vmatmul.f32.gmra.mxu0 %v194
        %v392 = vpop.f32.mrf.mxu0
        %v393 = vadd.f32 0.0, %v392
        %394 = vmatmul.f32.gmra.mxu0 %v195
        %v395 = vpop.f32.mrf.mxu0
        %v396 = vadd.f32 0.0, %v395
        %397 = vmatmul.f32.gmra.mxu0 %v196
        %v398 = vpop.f32.mrf.mxu0
        %v399 = vadd.f32 0.0, %v398
        %400 = vmatmul.f32.gmra.mxu0 %v197
        %v401 = vpop.f32.mrf.mxu0
        %v402 = vadd.f32 0.0, %v401
        %403 = vmatmul.f32.gmra.mxu0 %v198
        %v404 = vpop.f32.mrf.mxu0
        %v405 = vadd.f32 0.0, %v404
        %406 = vmatmul.f32.gmra.mxu0 %v199
        %v407 = vpop.f32.mrf.mxu0
        %v408 = vadd.f32 0.0, %v407
        %409 = vmatmul.f32.gmra.mxu0 %v200
        %v410 = vpop.f32.mrf.mxu0
        %v411 = vadd.f32 0.0, %v410
        %412 = vmatmul.f32.gmra.mxu0 %v201
        %v413 = vpop.f32.mrf.mxu0
        %v414 = vadd.f32 0.0, %v413
        %415 = vmatmul.f32.gmra.mxu0 %v202
        %v416 = vpop.f32.mrf.mxu0
        %v417 = vadd.f32 0.0, %v416
        %418 = vdwg.mxu0
        %v419 = vmul.f32 %v178, %v178
        %v420 = vmul.f32 %v179, %v179
        %v421 = vmul.f32 %v180, %v180
        %v422 = vmul.f32 %v181, %v181
        %v423 = vmul.f32 %v182, %v182
        %v424 = vmul.f32 %v183, %v183
        %v425 = vmul.f32 %v184, %v184
        %v426 = vmul.f32 %v185, %v185
        %v427 = vmul.f32 %v186, %v186
        %v428 = vmul.f32 %v187, %v187
        %v429 = vmul.f32 %v188, %v188
        %v430 = vmul.f32 %v189, %v189
        %v431 = vmul.f32 %v190, %v190
        %v432 = vmul.f32 %v191, %v191
        %v433 = vmul.f32 %v192, %v192
        %v434 = vmul.f32 %v193, %v193
        %v435 = vmul.f32 %v194, %v194
        %v436 = vmul.f32 %v195, %v195
        %v437 = vmul.f32 %v196, %v196
        %v438 = vmul.f32 %v197, %v197
        %v439 = vmul.f32 %v198, %v198
        %v440 = vmul.f32 %v199, %v199
        %v441 = vmul.f32 %v200, %v200
        %v442 = vmul.f32 %v201, %v201
        %v443 = vmul.f32 %v202, %v202
        %444 = vadd.xlane.f32.xlu0 %v419
        %v445 = vpop.xlane.xlu0 %444
        %446 = vadd.xlane.f32.xlu0 %v420
        %v447 = vpop.xlane.xlu0 %446
        %448 = vadd.xlane.f32.xlu0 %v421
        %v449 = vpop.xlane.xlu0 %448
        %450 = vadd.xlane.f32.xlu0 %v422
        %v451 = vpop.xlane.xlu0 %450
        %452 = vadd.xlane.f32.xlu0 %v423
        %v453 = vpop.xlane.xlu0 %452
        %454 = vadd.xlane.f32.xlu0 %v424
        %v455 = vpop.xlane.xlu0 %454
        %456 = vadd.xlane.f32.xlu0 %v425
        %v457 = vpop.xlane.xlu0 %456
        %458 = vadd.xlane.f32.xlu0 %v426
        %v459 = vpop.xlane.xlu0 %458
        %460 = vadd.xlane.f32.xlu0 %v427
        %v461 = vpop.xlane.xlu0 %460
        %462 = vadd.xlane.f32.xlu0 %v428
        %v463 = vpop.xlane.xlu0 %462
        %464 = vadd.xlane.f32.xlu0 %v429
        %v465 = vpop.xlane.xlu0 %464
        %466 = vadd.xlane.f32.xlu0 %v430
        %v467 = vpop.xlane.xlu0 %466
        %468 = vadd.xlane.f32.xlu0 %v431
        %v469 = vpop.xlane.xlu0 %468
        %470 = vadd.xlane.f32.xlu0 %v432
        %v471 = vpop.xlane.xlu0 %470
        %472 = vadd.xlane.f32.xlu0 %v433
        %v473 = vpop.xlane.xlu0 %472
        %474 = vadd.xlane.f32.xlu0 %v434
        %v475 = vpop.xlane.xlu0 %474
        %476 = vadd.xlane.f32.xlu0 %v435
        %v477 = vpop.xlane.xlu0 %476
        %478 = vadd.xlane.f32.xlu0 %v436
        %v479 = vpop.xlane.xlu0 %478
        %480 = vadd.xlane.f32.xlu0 %v437
        %v481 = vpop.xlane.xlu0 %480
        %482 = vadd.xlane.f32.xlu0 %v438
        %v483 = vpop.xlane.xlu0 %482
        %484 = vadd.xlane.f32.xlu0 %v439
        %v485 = vpop.xlane.xlu0 %484
        %486 = vadd.xlane.f32.xlu0 %v440
        %v487 = vpop.xlane.xlu0 %486
        %488 = vadd.xlane.f32.xlu0 %v441
        %v489 = vpop.xlane.xlu0 %488
        %490 = vadd.xlane.f32.xlu0 %v442
        %v491 = vpop.xlane.xlu0 %490
        %492 = vadd.xlane.f32.xlu0 %v443
        %v493 = vpop.xlane.xlu0 %492
        %v494 = vrsqrt.pop %v445
        %v495 = vmul.f32 %v494, %v445
        %v496 = vmul.f32 %v495, %v494
        %v497 = vmul.f32 0.5, %v496
        %v498 = vsub.f32 1.5, %v497
        %v499 = vmul.f32 %v494, %v498
        %vm500 = vweird.f32 %v445
        %vm501 = vweird.f32 %v494
        %vm502 = vmor %vm500, %vm501
        %v503 = vsel %vm502, %v494, %v499
        %v504 = vrsqrt.pop %v447
        %v505 = vmul.f32 %v504, %v447
        %v506 = vmul.f32 %v505, %v504
        %v507 = vmul.f32 0.5, %v506
        %v508 = vsub.f32 1.5, %v507
        %v509 = vmul.f32 %v504, %v508
        %vm510 = vweird.f32 %v447
        %vm511 = vweird.f32 %v504
        %vm512 = vmor %vm510, %vm511
        %v513 = vsel %vm512, %v504, %v509
        %v514 = vrsqrt.pop %v449
        %v515 = vmul.f32 %v514, %v449
        %v516 = vmul.f32 %v515, %v514
        %v517 = vmul.f32 0.5, %v516
        %v518 = vsub.f32 1.5, %v517
        %v519 = vmul.f32 %v514, %v518
        %vm520 = vweird.f32 %v449
        %vm521 = vweird.f32 %v514
        %vm522 = vmor %vm520, %vm521
        %v523 = vsel %vm522, %v514, %v519
        %v524 = vrsqrt.pop %v451
        %v525 = vmul.f32 %v524, %v451
        %v526 = vmul.f32 %v525, %v524
        %v527 = vmul.f32 0.5, %v526
        %v528 = vsub.f32 1.5, %v527
        %v529 = vmul.f32 %v524, %v528
        %vm530 = vweird.f32 %v451
        %vm531 = vweird.f32 %v524
        %vm532 = vmor %vm530, %vm531
        %v533 = vsel %vm532, %v524, %v529
        %v534 = vrsqrt.pop %v453
        %v535 = vmul.f32 %v534, %v453
        %v536 = vmul.f32 %v535, %v534
        %v537 = vmul.f32 0.5, %v536
        %v538 = vsub.f32 1.5, %v537
        %v539 = vmul.f32 %v534, %v538
        %vm540 = vweird.f32 %v453
        %vm541 = vweird.f32 %v534
        %vm542 = vmor %vm540, %vm541
        %v543 = vsel %vm542, %v534, %v539
        %v544 = vrsqrt.pop %v455
        %v545 = vmul.f32 %v544, %v455
        %v546 = vmul.f32 %v545, %v544
        %v547 = vmul.f32 0.5, %v546
        %v548 = vsub.f32 1.5, %v547
        %v549 = vmul.f32 %v544, %v548
        %vm550 = vweird.f32 %v455
        %vm551 = vweird.f32 %v544
        %vm552 = vmor %vm550, %vm551
        %v553 = vsel %vm552, %v544, %v549
        %v554 = vrsqrt.pop %v457
        %v555 = vmul.f32 %v554, %v457
        %v556 = vmul.f32 %v555, %v554
        %v557 = vmul.f32 0.5, %v556
        %v558 = vsub.f32 1.5, %v557
        %v559 = vmul.f32 %v554, %v558
        %vm560 = vweird.f32 %v457
        %vm561 = vweird.f32 %v554
        %vm562 = vmor %vm560, %vm561
        %v563 = vsel %vm562, %v554, %v559
        %v564 = vrsqrt.pop %v459
        %v565 = vmul.f32 %v564, %v459
        %v566 = vmul.f32 %v565, %v564
        %v567 = vmul.f32 0.5, %v566
        %v568 = vsub.f32 1.5, %v567
        %v569 = vmul.f32 %v564, %v568
        %vm570 = vweird.f32 %v459
        %vm571 = vweird.f32 %v564
        %vm572 = vmor %vm570, %vm571
        %v573 = vsel %vm572, %v564, %v569
        %v574 = vrsqrt.pop %v461
        %v575 = vmul.f32 %v574, %v461
        %v576 = vmul.f32 %v575, %v574
        %v577 = vmul.f32 0.5, %v576
        %v578 = vsub.f32 1.5, %v577
        %v579 = vmul.f32 %v574, %v578
        %vm580 = vweird.f32 %v461
        %vm581 = vweird.f32 %v574
        %vm582 = vmor %vm580, %vm581
        %v583 = vsel %vm582, %v574, %v579
        %v584 = vrsqrt.pop %v463
        %v585 = vmul.f32 %v584, %v463
        %v586 = vmul.f32 %v585, %v584
        %v587 = vmul.f32 0.5, %v586
        %v588 = vsub.f32 1.5, %v587
        %v589 = vmul.f32 %v584, %v588
        %vm590 = vweird.f32 %v463
        %vm591 = vweird.f32 %v584
        %vm592 = vmor %vm590, %vm591
        %v593 = vsel %vm592, %v584, %v589
        %v594 = vrsqrt.pop %v465
        %v595 = vmul.f32 %v594, %v465
        %v596 = vmul.f32 %v595, %v594
        %v597 = vmul.f32 0.5, %v596
        %v598 = vsub.f32 1.5, %v597
        %v599 = vmul.f32 %v594, %v598
        %vm600 = vweird.f32 %v465
        %vm601 = vweird.f32 %v594
        %vm602 = vmor %vm600, %vm601
        %v603 = vsel %vm602, %v594, %v599
        %v604 = vrsqrt.pop %v467
        %v605 = vmul.f32 %v604, %v467
        %v606 = vmul.f32 %v605, %v604
        %v607 = vmul.f32 0.5, %v606
        %v608 = vsub.f32 1.5, %v607
        %v609 = vmul.f32 %v604, %v608
        %vm610 = vweird.f32 %v467
        %vm611 = vweird.f32 %v604
        %vm612 = vmor %vm610, %vm611
        %v613 = vsel %vm612, %v604, %v609
        %v614 = vrsqrt.pop %v469
        %v615 = vmul.f32 %v614, %v469
        %v616 = vmul.f32 %v615, %v614
        %v617 = vmul.f32 0.5, %v616
        %v618 = vsub.f32 1.5, %v617
        %v619 = vmul.f32 %v614, %v618
        %vm620 = vweird.f32 %v469
        %vm621 = vweird.f32 %v614
        %vm622 = vmor %vm620, %vm621
        %v623 = vsel %vm622, %v614, %v619
        %v624 = vrsqrt.pop %v471
        %v625 = vmul.f32 %v624, %v471
        %v626 = vmul.f32 %v625, %v624
        %v627 = vmul.f32 0.5, %v626
        %v628 = vsub.f32 1.5, %v627
        %v629 = vmul.f32 %v624, %v628
        %vm630 = vweird.f32 %v471
        %vm631 = vweird.f32 %v624
        %vm632 = vmor %vm630, %vm631
        %v633 = vsel %vm632, %v624, %v629
        %v634 = vrsqrt.pop %v473
        %v635 = vmul.f32 %v634, %v473
        %v636 = vmul.f32 %v635, %v634
        %v637 = vmul.f32 0.5, %v636
        %v638 = vsub.f32 1.5, %v637
        %v639 = vmul.f32 %v634, %v638
        %vm640 = vweird.f32 %v473
        %vm641 = vweird.f32 %v634
        %vm642 = vmor %vm640, %vm641
        %v643 = vsel %vm642, %v634, %v639
        %v644 = vrsqrt.pop %v475
        %v645 = vmul.f32 %v644, %v475
        %v646 = vmul.f32 %v645, %v644
        %v647 = vmul.f32 0.5, %v646
        %v648 = vsub.f32 1.5, %v647
        %v649 = vmul.f32 %v644, %v648
        %vm650 = vweird.f32 %v475
        %vm651 = vweird.f32 %v644
        %vm652 = vmor %vm650, %vm651
        %v653 = vsel %vm652, %v644, %v649
        %v654 = vrsqrt.pop %v477
        %v655 = vmul.f32 %v654, %v477
        %v656 = vmul.f32 %v655, %v654
        %v657 = vmul.f32 0.5, %v656
        %v658 = vsub.f32 1.5, %v657
        %v659 = vmul.f32 %v654, %v658
        %vm660 = vweird.f32 %v477
        %vm661 = vweird.f32 %v654
        %vm662 = vmor %vm660, %vm661
        %v663 = vsel %vm662, %v654, %v659
        %v664 = vrsqrt.pop %v479
        %v665 = vmul.f32 %v664, %v479
        %v666 = vmul.f32 %v665, %v664
        %v667 = vmul.f32 0.5, %v666
        %v668 = vsub.f32 1.5, %v667
        %v669 = vmul.f32 %v664, %v668
        %vm670 = vweird.f32 %v479
        %vm671 = vweird.f32 %v664
        %vm672 = vmor %vm670, %vm671
        %v673 = vsel %vm672, %v664, %v669
        %v674 = vrsqrt.pop %v481
        %v675 = vmul.f32 %v674, %v481
        %v676 = vmul.f32 %v675, %v674
        %v677 = vmul.f32 0.5, %v676
        %v678 = vsub.f32 1.5, %v677
        %v679 = vmul.f32 %v674, %v678
        %vm680 = vweird.f32 %v481
        %vm681 = vweird.f32 %v674
        %vm682 = vmor %vm680, %vm681
        %v683 = vsel %vm682, %v674, %v679
        %v684 = vrsqrt.pop %v483
        %v685 = vmul.f32 %v684, %v483
        %v686 = vmul.f32 %v685, %v684
        %v687 = vmul.f32 0.5, %v686
        %v688 = vsub.f32 1.5, %v687
        %v689 = vmul.f32 %v684, %v688
        %vm690 = vweird.f32 %v483
        %vm691 = vweird.f32 %v684
        %vm692 = vmor %vm690, %vm691
        %v693 = vsel %vm692, %v684, %v689
        %v694 = vrsqrt.pop %v485
        %v695 = vmul.f32 %v694, %v485
        %v696 = vmul.f32 %v695, %v694
        %v697 = vmul.f32 0.5, %v696
        %v698 = vsub.f32 1.5, %v697
        %v699 = vmul.f32 %v694, %v698
        %vm700 = vweird.f32 %v485
        %vm701 = vweird.f32 %v694
        %vm702 = vmor %vm700, %vm701
        %v703 = vsel %vm702, %v694, %v699
        %v704 = vrsqrt.pop %v487
        %v705 = vmul.f32 %v704, %v487
        %v706 = vmul.f32 %v705, %v704
        %v707 = vmul.f32 0.5, %v706
        %v708 = vsub.f32 1.5, %v707
        %v709 = vmul.f32 %v704, %v708
        %vm710 = vweird.f32 %v487
        %vm711 = vweird.f32 %v704
        %vm712 = vmor %vm710, %vm711
        %v713 = vsel %vm712, %v704, %v709
        %v714 = vrsqrt.pop %v489
        %v715 = vmul.f32 %v714, %v489
        %v716 = vmul.f32 %v715, %v714
        %v717 = vmul.f32 0.5, %v716
        %v718 = vsub.f32 1.5, %v717
        %v719 = vmul.f32 %v714, %v718
        %vm720 = vweird.f32 %v489
        %vm721 = vweird.f32 %v714
        %vm722 = vmor %vm720, %vm721
        %v723 = vsel %vm722, %v714, %v719
        %v724 = vrsqrt.pop %v491
        %v725 = vmul.f32 %v724, %v491
        %v726 = vmul.f32 %v725, %v724
        %v727 = vmul.f32 0.5, %v726
        %v728 = vsub.f32 1.5, %v727
        %v729 = vmul.f32 %v724, %v728
        %vm730 = vweird.f32 %v491
        %vm731 = vweird.f32 %v724
        %vm732 = vmor %vm730, %vm731
        %v733 = vsel %vm732, %v724, %v729
        %v734 = vrsqrt.pop %v493
        %v735 = vmul.f32 %v734, %v493
        %v736 = vmul.f32 %v735, %v734
        %v737 = vmul.f32 0.5, %v736
        %v738 = vsub.f32 1.5, %v737
        %v739 = vmul.f32 %v734, %v738
        %vm740 = vweird.f32 %v493
        %vm741 = vweird.f32 %v734
        %vm742 = vmor %vm740, %vm741
        %v743 = vsel %vm742, %v734, %v739
        %v744 = vmul.f32 %v203, %v203
        %v745 = vmul.f32 %v204, %v204
        %v746 = vmul.f32 %v205, %v205
        %v747 = vmul.f32 %v206, %v206
        %v748 = vmul.f32 %v207, %v207
        %v749 = vmul.f32 %v208, %v208
        %v750 = vmul.f32 %v209, %v209
        %v751 = vmul.f32 %v210, %v210
        %v752 = vmul.f32 %v211, %v211
        %v753 = vmul.f32 %v212, %v212
        %v754 = vmul.f32 %v213, %v213
        %v755 = vmul.f32 %v214, %v214
        %v756 = vmul.f32 %v215, %v215
        %v757 = vmul.f32 %v216, %v216
        %v758 = vmul.f32 %v217, %v217
        %v759 = vmul.f32 %v218, %v218
        %v760 = vmul.f32 %v219, %v219
        %v761 = vmul.f32 %v220, %v220
        %v762 = vmul.f32 %v221, %v221
        %v763 = vmul.f32 %v222, %v222
        %v764 = vmul.f32 %v223, %v223
        %v765 = vmul.f32 %v224, %v224
        %v766 = vmul.f32 %v225, %v225
        %v767 = vmul.f32 %v226, %v226
        %v768 = vmul.f32 %v227, %v227
        %v769 = vmul.f32 %v228, %v228
        %v770 = vmul.f32 %v229, %v229
        %v771 = vmul.f32 %v230, %v230
        %v772 = vmul.f32 %v231, %v231
        %v773 = vmul.f32 %v232, %v232
        %v774 = vmul.f32 %v233, %v233
        %v775 = vmul.f32 %v234, %v234
        %776 = vadd.xlane.f32.xlu0 %v744
        %v777 = vpop.xlane.xlu0 %776
        %778 = vadd.xlane.f32.xlu0 %v745
        %v779 = vpop.xlane.xlu0 %778
        %780 = vadd.xlane.f32.xlu0 %v746
        %v781 = vpop.xlane.xlu0 %780
        %782 = vadd.xlane.f32.xlu0 %v747
        %v783 = vpop.xlane.xlu0 %782
        %784 = vadd.xlane.f32.xlu0 %v748
        %v785 = vpop.xlane.xlu0 %784
        %786 = vadd.xlane.f32.xlu0 %v749
        %v787 = vpop.xlane.xlu0 %786
        %788 = vadd.xlane.f32.xlu0 %v750
        %v789 = vpop.xlane.xlu0 %788
        %790 = vadd.xlane.f32.xlu0 %v751
        %v791 = vpop.xlane.xlu0 %790
        %792 = vadd.xlane.f32.xlu0 %v752
        %v793 = vpop.xlane.xlu0 %792
        %794 = vadd.xlane.f32.xlu0 %v753
        %v795 = vpop.xlane.xlu0 %794
        %796 = vadd.xlane.f32.xlu0 %v754
        %v797 = vpop.xlane.xlu0 %796
        %798 = vadd.xlane.f32.xlu0 %v755
        %v799 = vpop.xlane.xlu0 %798
        %800 = vadd.xlane.f32.xlu0 %v756
        %v801 = vpop.xlane.xlu0 %800
        %802 = vadd.xlane.f32.xlu0 %v757
        %v803 = vpop.xlane.xlu0 %802
        %804 = vadd.xlane.f32.xlu0 %v758
        %v805 = vpop.xlane.xlu0 %804
        %806 = vadd.xlane.f32.xlu0 %v759
        %v807 = vpop.xlane.xlu0 %806
        %808 = vadd.xlane.f32.xlu0 %v760
        %v809 = vpop.xlane.xlu0 %808
        %810 = vadd.xlane.f32.xlu0 %v761
        %v811 = vpop.xlane.xlu0 %810
        %812 = vadd.xlane.f32.xlu0 %v762
        %v813 = vpop.xlane.xlu0 %812
        %814 = vadd.xlane.f32.xlu0 %v763
        %v815 = vpop.xlane.xlu0 %814
        %816 = vadd.xlane.f32.xlu0 %v764
        %v817 = vpop.xlane.xlu0 %816
        %818 = vadd.xlane.f32.xlu0 %v765
        %v819 = vpop.xlane.xlu0 %818
        %820 = vadd.xlane.f32.xlu0 %v766
        %v821 = vpop.xlane.xlu0 %820
        %822 = vadd.xlane.f32.xlu0 %v767
        %v823 = vpop.xlane.xlu0 %822
        %824 = vadd.xlane.f32.xlu0 %v768
        %v825 = vpop.xlane.xlu0 %824
        %826 = vadd.xlane.f32.xlu0 %v769
        %v827 = vpop.xlane.xlu0 %826
        %828 = vadd.xlane.f32.xlu0 %v770
        %v829 = vpop.xlane.xlu0 %828
        %830 = vadd.xlane.f32.xlu0 %v771
        %v831 = vpop.xlane.xlu0 %830
        %832 = vadd.xlane.f32.xlu0 %v772
        %v833 = vpop.xlane.xlu0 %832
        %834 = vadd.xlane.f32.xlu0 %v773
        %v835 = vpop.xlane.xlu0 %834
        %836 = vadd.xlane.f32.xlu0 %v774
        %v837 = vpop.xlane.xlu0 %836
        %838 = vadd.xlane.f32.xlu0 %v775
        %v839 = vpop.xlane.xlu0 %838
        %v840 = vrsqrt.pop %v777
        %v841 = vmul.f32 %v840, %v777
        %v842 = vmul.f32 %v841, %v840
        %v843 = vmul.f32 0.5, %v842
        %v844 = vsub.f32 1.5, %v843
        %v845 = vmul.f32 %v840, %v844
        %vm846 = vweird.f32 %v777
        %vm847 = vweird.f32 %v840
        %vm848 = vmor %vm846, %vm847
        %v849 = vsel %vm848, %v840, %v845
        %v850 = vrsqrt.pop %v779
        %v851 = vmul.f32 %v850, %v779
        %v852 = vmul.f32 %v851, %v850
        %v853 = vmul.f32 0.5, %v852
        %v854 = vsub.f32 1.5, %v853
        %v855 = vmul.f32 %v850, %v854
        %vm856 = vweird.f32 %v779
        %vm857 = vweird.f32 %v850
        %vm858 = vmor %vm856, %vm857
        %v859 = vsel %vm858, %v850, %v855
        %v860 = vrsqrt.pop %v781
        %v861 = vmul.f32 %v860, %v781
        %v862 = vmul.f32 %v861, %v860
        %v863 = vmul.f32 0.5, %v862
        %v864 = vsub.f32 1.5, %v863
        %v865 = vmul.f32 %v860, %v864
        %vm866 = vweird.f32 %v781
        %vm867 = vweird.f32 %v860
        %vm868 = vmor %vm866, %vm867
        %v869 = vsel %vm868, %v860, %v865
        %v870 = vrsqrt.pop %v783
        %v871 = vmul.f32 %v870, %v783
        %v872 = vmul.f32 %v871, %v870
        %v873 = vmul.f32 0.5, %v872
        %v874 = vsub.f32 1.5, %v873
        %v875 = vmul.f32 %v870, %v874
        %vm876 = vweird.f32 %v783
        %vm877 = vweird.f32 %v870
        %vm878 = vmor %vm876, %vm877
        %v879 = vsel %vm878, %v870, %v875
        %v880 = vrsqrt.pop %v785
        %v881 = vmul.f32 %v880, %v785
        %v882 = vmul.f32 %v881, %v880
        %v883 = vmul.f32 0.5, %v882
        %v884 = vsub.f32 1.5, %v883
        %v885 = vmul.f32 %v880, %v884
        %vm886 = vweird.f32 %v785
        %vm887 = vweird.f32 %v880
        %vm888 = vmor %vm886, %vm887
        %v889 = vsel %vm888, %v880, %v885
        %v890 = vrsqrt.pop %v787
        %v891 = vmul.f32 %v890, %v787
        %v892 = vmul.f32 %v891, %v890
        %v893 = vmul.f32 0.5, %v892
        %v894 = vsub.f32 1.5, %v893
        %v895 = vmul.f32 %v890, %v894
        %vm896 = vweird.f32 %v787
        %vm897 = vweird.f32 %v890
        %vm898 = vmor %vm896, %vm897
        %v899 = vsel %vm898, %v890, %v895
        %v900 = vrsqrt.pop %v789
        %v901 = vmul.f32 %v900, %v789
        %v902 = vmul.f32 %v901, %v900
        %v903 = vmul.f32 0.5, %v902
        %v904 = vsub.f32 1.5, %v903
        %v905 = vmul.f32 %v900, %v904
        %vm906 = vweird.f32 %v789
        %vm907 = vweird.f32 %v900
        %vm908 = vmor %vm906, %vm907
        %v909 = vsel %vm908, %v900, %v905
        %v910 = vrsqrt.pop %v791
        %v911 = vmul.f32 %v910, %v791
        %v912 = vmul.f32 %v911, %v910
        %v913 = vmul.f32 0.5, %v912
        %v914 = vsub.f32 1.5, %v913
        %v915 = vmul.f32 %v910, %v914
        %vm916 = vweird.f32 %v791
        %vm917 = vweird.f32 %v910
        %vm918 = vmor %vm916, %vm917
        %v919 = vsel %vm918, %v910, %v915
        %v920 = vrsqrt.pop %v793
        %v921 = vmul.f32 %v920, %v793
        %v922 = vmul.f32 %v921, %v920
        %v923 = vmul.f32 0.5, %v922
        %v924 = vsub.f32 1.5, %v923
        %v925 = vmul.f32 %v920, %v924
        %vm926 = vweird.f32 %v793
        %vm927 = vweird.f32 %v920
        %vm928 = vmor %vm926, %vm927
        %v929 = vsel %vm928, %v920, %v925
        %v930 = vrsqrt.pop %v795
        %v931 = vmul.f32 %v930, %v795
        %v932 = vmul.f32 %v931, %v930
        %v933 = vmul.f32 0.5, %v932
        %v934 = vsub.f32 1.5, %v933
        %v935 = vmul.f32 %v930, %v934
        %vm936 = vweird.f32 %v795
        %vm937 = vweird.f32 %v930
        %vm938 = vmor %vm936, %vm937
        %v939 = vsel %vm938, %v930, %v935
        %v940 = vrsqrt.pop %v797
        %v941 = vmul.f32 %v940, %v797
        %v942 = vmul.f32 %v941, %v940
        %v943 = vmul.f32 0.5, %v942
        %v944 = vsub.f32 1.5, %v943
        %v945 = vmul.f32 %v940, %v944
        %vm946 = vweird.f32 %v797
        %vm947 = vweird.f32 %v940
        %vm948 = vmor %vm946, %vm947
        %v949 = vsel %vm948, %v940, %v945
        %v950 = vrsqrt.pop %v799
        %v951 = vmul.f32 %v950, %v799
        %v952 = vmul.f32 %v951, %v950
        %v953 = vmul.f32 0.5, %v952
        %v954 = vsub.f32 1.5, %v953
        %v955 = vmul.f32 %v950, %v954
        %vm956 = vweird.f32 %v799
        %vm957 = vweird.f32 %v950
        %vm958 = vmor %vm956, %vm957
        %v959 = vsel %vm958, %v950, %v955
        %v960 = vrsqrt.pop %v801
        %v961 = vmul.f32 %v960, %v801
        %v962 = vmul.f32 %v961, %v960
        %v963 = vmul.f32 0.5, %v962
        %v964 = vsub.f32 1.5, %v963
        %v965 = vmul.f32 %v960, %v964
        %vm966 = vweird.f32 %v801
        %vm967 = vweird.f32 %v960
        %vm968 = vmor %vm966, %vm967
        %v969 = vsel %vm968, %v960, %v965
        %v970 = vrsqrt.pop %v803
        %v971 = vmul.f32 %v970, %v803
        %v972 = vmul.f32 %v971, %v970
        %v973 = vmul.f32 0.5, %v972
        %v974 = vsub.f32 1.5, %v973
        %v975 = vmul.f32 %v970, %v974
        %vm976 = vweird.f32 %v803
        %vm977 = vweird.f32 %v970
        %vm978 = vmor %vm976, %vm977
        %v979 = vsel %vm978, %v970, %v975
        %v980 = vrsqrt.pop %v805
        %v981 = vmul.f32 %v980, %v805
        %v982 = vmul.f32 %v981, %v980
        %v983 = vmul.f32 0.5, %v982
        %v984 = vsub.f32 1.5, %v983
        %v985 = vmul.f32 %v980, %v984
        %vm986 = vweird.f32 %v805
        %vm987 = vweird.f32 %v980
        %vm988 = vmor %vm986, %vm987
        %v989 = vsel %vm988, %v980, %v985
        %v990 = vrsqrt.pop %v807
        %v991 = vmul.f32 %v990, %v807
        %v992 = vmul.f32 %v991, %v990
        %v993 = vmul.f32 0.5, %v992
        %v994 = vsub.f32 1.5, %v993
        %v995 = vmul.f32 %v990, %v994
        %vm996 = vweird.f32 %v807
        %vm997 = vweird.f32 %v990
        %vm998 = vmor %vm996, %vm997
        %v999 = vsel %vm998, %v990, %v995
        %v1000 = vrsqrt.pop %v809
        %v1001 = vmul.f32 %v1000, %v809
        %v1002 = vmul.f32 %v1001, %v1000
        %v1003 = vmul.f32 0.5, %v1002
        %v1004 = vsub.f32 1.5, %v1003
        %v1005 = vmul.f32 %v1000, %v1004
        %vm1006 = vweird.f32 %v809
        %vm1007 = vweird.f32 %v1000
        %vm1008 = vmor %vm1006, %vm1007
        %v1009 = vsel %vm1008, %v1000, %v1005
        %v1010 = vrsqrt.pop %v811
        %v1011 = vmul.f32 %v1010, %v811
        %v1012 = vmul.f32 %v1011, %v1010
        %v1013 = vmul.f32 0.5, %v1012
        %v1014 = vsub.f32 1.5, %v1013
        %v1015 = vmul.f32 %v1010, %v1014
        %vm1016 = vweird.f32 %v811
        %vm1017 = vweird.f32 %v1010
        %vm1018 = vmor %vm1016, %vm1017
        %v1019 = vsel %vm1018, %v1010, %v1015
        %v1020 = vrsqrt.pop %v813
        %v1021 = vmul.f32 %v1020, %v813
        %v1022 = vmul.f32 %v1021, %v1020
        %v1023 = vmul.f32 0.5, %v1022
        %v1024 = vsub.f32 1.5, %v1023
        %v1025 = vmul.f32 %v1020, %v1024
        %vm1026 = vweird.f32 %v813
        %vm1027 = vweird.f32 %v1020
        %vm1028 = vmor %vm1026, %vm1027
        %v1029 = vsel %vm1028, %v1020, %v1025
        %v1030 = vrsqrt.pop %v815
        %v1031 = vmul.f32 %v1030, %v815
        %v1032 = vmul.f32 %v1031, %v1030
        %v1033 = vmul.f32 0.5, %v1032
        %v1034 = vsub.f32 1.5, %v1033
        %v1035 = vmul.f32 %v1030, %v1034
        %vm1036 = vweird.f32 %v815
        %vm1037 = vweird.f32 %v1030
        %vm1038 = vmor %vm1036, %vm1037
        %v1039 = vsel %vm1038, %v1030, %v1035
        %v1040 = vrsqrt.pop %v817
        %v1041 = vmul.f32 %v1040, %v817
        %v1042 = vmul.f32 %v1041, %v1040
        %v1043 = vmul.f32 0.5, %v1042
        %v1044 = vsub.f32 1.5, %v1043
        %v1045 = vmul.f32 %v1040, %v1044
        %vm1046 = vweird.f32 %v817
        %vm1047 = vweird.f32 %v1040
        %vm1048 = vmor %vm1046, %vm1047
        %v1049 = vsel %vm1048, %v1040, %v1045
        %v1050 = vrsqrt.pop %v819
        %v1051 = vmul.f32 %v1050, %v819
        %v1052 = vmul.f32 %v1051, %v1050
        %v1053 = vmul.f32 0.5, %v1052
        %v1054 = vsub.f32 1.5, %v1053
        %v1055 = vmul.f32 %v1050, %v1054
        %vm1056 = vweird.f32 %v819
        %vm1057 = vweird.f32 %v1050
        %vm1058 = vmor %vm1056, %vm1057
        %v1059 = vsel %vm1058, %v1050, %v1055
        %v1060 = vrsqrt.pop %v821
        %v1061 = vmul.f32 %v1060, %v821
        %v1062 = vmul.f32 %v1061, %v1060
        %v1063 = vmul.f32 0.5, %v1062
        %v1064 = vsub.f32 1.5, %v1063
        %v1065 = vmul.f32 %v1060, %v1064
        %vm1066 = vweird.f32 %v821
        %vm1067 = vweird.f32 %v1060
        %vm1068 = vmor %vm1066, %vm1067
        %v1069 = vsel %vm1068, %v1060, %v1065
        %v1070 = vrsqrt.pop %v823
        %v1071 = vmul.f32 %v1070, %v823
        %v1072 = vmul.f32 %v1071, %v1070
        %v1073 = vmul.f32 0.5, %v1072
        %v1074 = vsub.f32 1.5, %v1073
        %v1075 = vmul.f32 %v1070, %v1074
        %vm1076 = vweird.f32 %v823
        %vm1077 = vweird.f32 %v1070
        %vm1078 = vmor %vm1076, %vm1077
        %v1079 = vsel %vm1078, %v1070, %v1075
        %v1080 = vrsqrt.pop %v825
        %v1081 = vmul.f32 %v1080, %v825
        %v1082 = vmul.f32 %v1081, %v1080
        %v1083 = vmul.f32 0.5, %v1082
        %v1084 = vsub.f32 1.5, %v1083
        %v1085 = vmul.f32 %v1080, %v1084
        %vm1086 = vweird.f32 %v825
        %vm1087 = vweird.f32 %v1080
        %vm1088 = vmor %vm1086, %vm1087
        %v1089 = vsel %vm1088, %v1080, %v1085
        %v1090 = vrsqrt.pop %v827
        %v1091 = vmul.f32 %v1090, %v827
        %v1092 = vmul.f32 %v1091, %v1090
        %v1093 = vmul.f32 0.5, %v1092
        %v1094 = vsub.f32 1.5, %v1093
        %v1095 = vmul.f32 %v1090, %v1094
        %vm1096 = vweird.f32 %v827
        %vm1097 = vweird.f32 %v1090
        %vm1098 = vmor %vm1096, %vm1097
        %v1099 = vsel %vm1098, %v1090, %v1095
        %v1100 = vrsqrt.pop %v829
        %v1101 = vmul.f32 %v1100, %v829
        %v1102 = vmul.f32 %v1101, %v1100
        %v1103 = vmul.f32 0.5, %v1102
        %v1104 = vsub.f32 1.5, %v1103
        %v1105 = vmul.f32 %v1100, %v1104
        %vm1106 = vweird.f32 %v829
        %vm1107 = vweird.f32 %v1100
        %vm1108 = vmor %vm1106, %vm1107
        %v1109 = vsel %vm1108, %v1100, %v1105
        %v1110 = vrsqrt.pop %v831
        %v1111 = vmul.f32 %v1110, %v831
        %v1112 = vmul.f32 %v1111, %v1110
        %v1113 = vmul.f32 0.5, %v1112
        %v1114 = vsub.f32 1.5, %v1113
        %v1115 = vmul.f32 %v1110, %v1114
        %vm1116 = vweird.f32 %v831
        %vm1117 = vweird.f32 %v1110
        %vm1118 = vmor %vm1116, %vm1117
        %v1119 = vsel %vm1118, %v1110, %v1115
        %v1120 = vrsqrt.pop %v833
        %v1121 = vmul.f32 %v1120, %v833
        %v1122 = vmul.f32 %v1121, %v1120
        %v1123 = vmul.f32 0.5, %v1122
        %v1124 = vsub.f32 1.5, %v1123
        %v1125 = vmul.f32 %v1120, %v1124
        %vm1126 = vweird.f32 %v833
        %vm1127 = vweird.f32 %v1120
        %vm1128 = vmor %vm1126, %vm1127
        %v1129 = vsel %vm1128, %v1120, %v1125
        %v1130 = vrsqrt.pop %v835
        %v1131 = vmul.f32 %v1130, %v835
        %v1132 = vmul.f32 %v1131, %v1130
        %v1133 = vmul.f32 0.5, %v1132
        %v1134 = vsub.f32 1.5, %v1133
        %v1135 = vmul.f32 %v1130, %v1134
        %vm1136 = vweird.f32 %v835
        %vm1137 = vweird.f32 %v1130
        %vm1138 = vmor %vm1136, %vm1137
        %v1139 = vsel %vm1138, %v1130, %v1135
        %v1140 = vrsqrt.pop %v837
        %v1141 = vmul.f32 %v1140, %v837
        %v1142 = vmul.f32 %v1141, %v1140
        %v1143 = vmul.f32 0.5, %v1142
        %v1144 = vsub.f32 1.5, %v1143
        %v1145 = vmul.f32 %v1140, %v1144
        %vm1146 = vweird.f32 %v837
        %vm1147 = vweird.f32 %v1140
        %vm1148 = vmor %vm1146, %vm1147
        %v1149 = vsel %vm1148, %v1140, %v1145
        %v1150 = vrsqrt.pop %v839
        %v1151 = vmul.f32 %v1150, %v839
        %v1152 = vmul.f32 %v1151, %v1150
        %v1153 = vmul.f32 0.5, %v1152
        %v1154 = vsub.f32 1.5, %v1153
        %v1155 = vmul.f32 %v1150, %v1154
        %vm1156 = vweird.f32 %v839
        %vm1157 = vweird.f32 %v1150
        %vm1158 = vmor %vm1156, %vm1157
        %v1159 = vsel %vm1158, %v1150, %v1155
        %v1160 = vmul.f32 %v253, %v503
        %v1161 = vmul.f32 %v345, %v503
        %v1162 = vmul.f32 %v256, %v513
        %v1163 = vmul.f32 %v348, %v513
        %v1164 = vmul.f32 %v259, %v523
        %v1165 = vmul.f32 %v351, %v523
        %v1166 = vmul.f32 %v262, %v533
        %v1167 = vmul.f32 %v354, %v533
        %v1168 = vmul.f32 %v265, %v543
        %v1169 = vmul.f32 %v357, %v543
        %v1170 = vmul.f32 %v268, %v553
        %v1171 = vmul.f32 %v360, %v553
        %v1172 = vmul.f32 %v271, %v563
        %v1173 = vmul.f32 %v363, %v563
        %v1174 = vmul.f32 %v274, %v573
        %v1175 = vmul.f32 %v366, %v573
        %v1176 = vmul.f32 %v277, %v583
        %v1177 = vmul.f32 %v369, %v583
        %v1178 = vmul.f32 %v280, %v593
        %v1179 = vmul.f32 %v372, %v593
        %v1180 = vmul.f32 %v283, %v603
        %v1181 = vmul.f32 %v375, %v603
        %v1182 = vmul.f32 %v286, %v613
        %v1183 = vmul.f32 %v378, %v613
        %v1184 = vmul.f32 %v289, %v623
        %v1185 = vmul.f32 %v381, %v623
        %v1186 = vmul.f32 %v292, %v633
        %v1187 = vmul.f32 %v384, %v633
        %v1188 = vmul.f32 %v295, %v643
        %v1189 = vmul.f32 %v387, %v643
        %v1190 = vmul.f32 %v298, %v653
        %v1191 = vmul.f32 %v390, %v653
        %v1192 = vmul.f32 %v301, %v663
        %v1193 = vmul.f32 %v393, %v663
        %v1194 = vmul.f32 %v304, %v673
        %v1195 = vmul.f32 %v396, %v673
        %v1196 = vmul.f32 %v307, %v683
        %v1197 = vmul.f32 %v399, %v683
        %v1198 = vmul.f32 %v310, %v693
        %v1199 = vmul.f32 %v402, %v693
        %v1200 = vmul.f32 %v313, %v703
        %v1201 = vmul.f32 %v405, %v703
        %v1202 = vmul.f32 %v316, %v713
        %v1203 = vmul.f32 %v408, %v713
        %v1204 = vmul.f32 %v319, %v723
        %v1205 = vmul.f32 %v411, %v723
        %v1206 = vmul.f32 %v322, %v733
        %v1207 = vmul.f32 %v414, %v733
        %v1208 = vmul.f32 %v325, %v743
        %v1209 = vmul.f32 %v417, %v743
        %1210 = vxpose.xlu0.b32.start [1/16] %v849, 128
        %1211 = vxpose.xlu0.b32.cont [2/16] %v859, 128
        %1212 = vxpose.xlu0.b32.cont [3/16] %v869, 128
        %1213 = vxpose.xlu0.b32.cont [4/16] %v879, 128
        %1214 = vxpose.xlu0.b32.cont [5/16] %v889, 128
        %1215 = vxpose.xlu0.b32.cont [6/16] %v899, 128
        %1216 = vxpose.xlu0.b32.cont [7/16] %v909, 128
        %1217 = vxpose.xlu0.b32.cont [8/16] %v919, 128
        %1218 = vxpose.xlu0.b32.cont [9/16] %v929, 128
        %1219 = vxpose.xlu0.b32.cont [10/16] %v939, 128
        %1220 = vxpose.xlu0.b32.cont [11/16] %v949, 128
        %1221 = vxpose.xlu0.b32.cont [12/16] %v959, 128
        %1222 = vxpose.xlu0.b32.cont [13/16] %v969, 128
        %1223 = vxpose.xlu0.b32.cont [14/16] %v979, 128
        %1224 = vxpose.xlu0.b32.cont [15/16] %v989, 128
        %1225 = vxpose.xlu0.b32.end [16/16] %v999, 128
        %v1226 = vpop.trf.xlu0
        %v1227 = vpop.trf.xlu0
        %v1228 = vpop.trf.xlu0
        %v1229 = vpop.trf.xlu0
        %v1230 = vpop.trf.xlu0
        %v1231 = vpop.trf.xlu0
        %v1232 = vpop.trf.xlu0
        %v1233 = vpop.trf.xlu0
        %v1234 = vpop.trf.xlu0
        %v1235 = vpop.trf.xlu0
        %v1236 = vpop.trf.xlu0
        %v1237 = vpop.trf.xlu0
        %v1238 = vpop.trf.xlu0
        %v1239 = vpop.trf.xlu0
        %v1240 = vpop.trf.xlu0
        %v1241 = vpop.trf.xlu0
        %1242 = vxpose.xlu0.b32.start [1/16] %v1009, 128
        %1243 = vxpose.xlu0.b32.cont [2/16] %v1019, 128
        %1244 = vxpose.xlu0.b32.cont [3/16] %v1029, 128
        %1245 = vxpose.xlu0.b32.cont [4/16] %v1039, 128
        %1246 = vxpose.xlu0.b32.cont [5/16] %v1049, 128
        %1247 = vxpose.xlu0.b32.cont [6/16] %v1059, 128
        %1248 = vxpose.xlu0.b32.cont [7/16] %v1069, 128
        %1249 = vxpose.xlu0.b32.cont [8/16] %v1079, 128
        %1250 = vxpose.xlu0.b32.cont [9/16] %v1089, 128
        %1251 = vxpose.xlu0.b32.cont [10/16] %v1099, 128
        %1252 = vxpose.xlu0.b32.cont [11/16] %v1109, 128
        %1253 = vxpose.xlu0.b32.cont [12/16] %v1119, 128
        %1254 = vxpose.xlu0.b32.cont [13/16] %v1129, 128
        %1255 = vxpose.xlu0.b32.cont [14/16] %v1139, 128
        %1256 = vxpose.xlu0.b32.cont [15/16] %v1149, 128
        %1257 = vxpose.xlu0.b32.end [16/16] %v1159, 128
        %v1258 = vpop.trf.xlu0
        %v1259 = vpop.trf.xlu0
        %v1260 = vpop.trf.xlu0
        %v1261 = vpop.trf.xlu0
        %v1262 = vpop.trf.xlu0
        %v1263 = vpop.trf.xlu0
        %v1264 = vpop.trf.xlu0
        %v1265 = vpop.trf.xlu0
        %v1266 = vpop.trf.xlu0
        %v1267 = vpop.trf.xlu0
        %v1268 = vpop.trf.xlu0
        %v1269 = vpop.trf.xlu0
        %v1270 = vpop.trf.xlu0
        %v1271 = vpop.trf.xlu0
        %v1272 = vpop.trf.xlu0
        %v1273 = vpop.trf.xlu0
        %v1274 = vperm.slane %v1226, 0
        %v1275 = vperm.slane %v1258, 0
        %v1276 = vmul.f32 %v1160, %v1274
        %v1277 = vmul.f32 %v1161, %v1275
        %v1278 = vmul.f32 %v1162, %v1274
        %v1279 = vmul.f32 %v1163, %v1275
        %v1280 = vmul.f32 %v1164, %v1274
        %v1281 = vmul.f32 %v1165, %v1275
        %v1282 = vmul.f32 %v1166, %v1274
        %v1283 = vmul.f32 %v1167, %v1275
        %v1284 = vmul.f32 %v1168, %v1274
        %v1285 = vmul.f32 %v1169, %v1275
        %v1286 = vmul.f32 %v1170, %v1274
        %v1287 = vmul.f32 %v1171, %v1275
        %v1288 = vmul.f32 %v1172, %v1274
        %v1289 = vmul.f32 %v1173, %v1275
        %v1290 = vmul.f32 %v1174, %v1274
        %v1291 = vmul.f32 %v1175, %v1275
        %v1292 = vmul.f32 %v1176, %v1274
        %v1293 = vmul.f32 %v1177, %v1275
        %v1294 = vmul.f32 %v1178, %v1274
        %v1295 = vmul.f32 %v1179, %v1275
        %v1296 = vmul.f32 %v1180, %v1274
        %v1297 = vmul.f32 %v1181, %v1275
        %v1298 = vmul.f32 %v1182, %v1274
        %v1299 = vmul.f32 %v1183, %v1275
        %v1300 = vmul.f32 %v1184, %v1274
        %v1301 = vmul.f32 %v1185, %v1275
        %v1302 = vmul.f32 %v1186, %v1274
        %v1303 = vmul.f32 %v1187, %v1275
        %v1304 = vmul.f32 %v1188, %v1274
        %v1305 = vmul.f32 %v1189, %v1275
        %v1306 = vmul.f32 %v1190, %v1274
        %v1307 = vmul.f32 %v1191, %v1275
        %v1308 = vmul.f32 %v1192, %v1274
        %v1309 = vmul.f32 %v1193, %v1275
        %v1310 = vmul.f32 %v1194, %v1274
        %v1311 = vmul.f32 %v1195, %v1275
        %v1312 = vmul.f32 %v1196, %v1274
        %v1313 = vmul.f32 %v1197, %v1275
        %v1314 = vmul.f32 %v1198, %v1274
        %v1315 = vmul.f32 %v1199, %v1275
        %v1316 = vmul.f32 %v1200, %v1274
        %v1317 = vmul.f32 %v1201, %v1275
        %v1318 = vmul.f32 %v1202, %v1274
        %v1319 = vmul.f32 %v1203, %v1275
        %v1320 = vmul.f32 %v1204, %v1274
        %v1321 = vmul.f32 %v1205, %v1275
        %v1322 = vmul.f32 %v1206, %v1274
        %v1323 = vmul.f32 %v1207, %v1275
        %v1324 = vmul.f32 %v1208, %v1274
        %v1325 = vmul.f32 %v1209, %v1275
        %1326 = vst [vmem:[%s163] sm:$0xff] %v1276
        %1327 = vst [vmem:[%s163 + $0x8] sm:$0xff] %v1277
        %1328 = vst [vmem:[%s163 + $0x10] sm:$0xff] %v1278
        %1329 = vst [vmem:[%s163 + $0x18] sm:$0xff] %v1279
        %1330 = vst [vmem:[%s163 + $0x20] sm:$0xff] %v1280
        %1331 = vst [vmem:[%s163 + $0x28] sm:$0xff] %v1281
        %1332 = vst [vmem:[%s163 + $0x30] sm:$0xff] %v1282
        %1333 = vst [vmem:[%s163 + $0x38] sm:$0xff] %v1283
        %1334 = vst [vmem:[%s163 + $0x40] sm:$0xff] %v1284
        %1335 = vst [vmem:[%s163 + $0x48] sm:$0xff] %v1285
        %1336 = vst [vmem:[%s163 + $0x50] sm:$0xff] %v1286
        %1337 = vst [vmem:[%s163 + $0x58] sm:$0xff] %v1287
        %1338 = vst [vmem:[%s163 + $0x60] sm:$0xff] %v1288
        %1339 = vst [vmem:[%s163 + $0x68] sm:$0xff] %v1289
        %1340 = vst [vmem:[%s163 + $0x70] sm:$0xff] %v1290
        %1341 = vst [vmem:[%s163 + $0x78] sm:$0xff] %v1291
        %1342 = vst [vmem:[%s163 + $0x80] sm:$0xff] %v1292
        %1343 = vst [vmem:[%s163 + $0x88] sm:$0xff] %v1293
        %1344 = vst [vmem:[%s163 + $0x90] sm:$0xff] %v1294
        %1345 = vst [vmem:[%s163 + $0x98] sm:$0xff] %v1295
        %1346 = vst [vmem:[%s163 + $0xa0] sm:$0xff] %v1296
        %1347 = vst [vmem:[%s163 + $0xa8] sm:$0xff] %v1297
        %1348 = vst [vmem:[%s163 + $0xb0] sm:$0xff] %v1298
        %1349 = vst [vmem:[%s163 + $0xb8] sm:$0xff] %v1299
        %1350 = vst [vmem:[%s163 + $0xc0] sm:$0xff] %v1300
        %1351 = vst [vmem:[%s163 + $0xc8] sm:$0xff] %v1301
        %1352 = vst [vmem:[%s163 + $0xd0] sm:$0xff] %v1302
        %1353 = vst [vmem:[%s163 + $0xd8] sm:$0xff] %v1303
        %1354 = vst [vmem:[%s163 + $0xe0] sm:$0xff] %v1304
        %1355 = vst [vmem:[%s163 + $0xe8] sm:$0xff] %v1305
        %1356 = vst [vmem:[%s163 + $0xf0] sm:$0xff] %v1306
        %1357 = vst [vmem:[%s163 + $0xf8] sm:$0xff] %v1307
        %1358 = vst [vmem:[%s163 + $0x100] sm:$0xff] %v1308
        %1359 = vst [vmem:[%s163 + $0x108] sm:$0xff] %v1309
        %1360 = vst [vmem:[%s163 + $0x110] sm:$0xff] %v1310
        %1361 = vst [vmem:[%s163 + $0x118] sm:$0xff] %v1311
        %1362 = vst [vmem:[%s163 + $0x120] sm:$0xff] %v1312
        %1363 = vst [vmem:[%s163 + $0x128] sm:$0xff] %v1313
        %1364 = vst [vmem:[%s163 + $0x130] sm:$0xff] %v1314
        %1365 = vst [vmem:[%s163 + $0x138] sm:$0xff] %v1315
        %1366 = vst [vmem:[%s163 + $0x140] sm:$0xff] %v1316
        %1367 = vst [vmem:[%s163 + $0x148] sm:$0xff] %v1317
        %1368 = vst [vmem:[%s163 + $0x150] sm:$0xff] %v1318
        %1369 = vst [vmem:[%s163 + $0x158] sm:$0xff] %v1319
        %1370 = vst [vmem:[%s163 + $0x160] sm:$0xff] %v1320
        %1371 = vst [vmem:[%s163 + $0x168] sm:$0xff] %v1321
        %1372 = vst [vmem:[%s163 + $0x170] sm:$0xff] %v1322
        %1373 = vst [vmem:[%s163 + $0x178] sm:$0xff] %v1323
        %1374 = vst [vmem:[%s163 + $0x180] sm:$0xff] %v1324
        %1375 = vst [vmem:[%s163 + $0x188] sm:$0xff] %v1325
        %s1376 = sand.u32 %s87, 1
        %s1377 = sand.u32 %s87, 1
        %s1378 = smul.addr %s1377, 400
        %s1379 = scalar_lea.vmem [#allocation2], %s1378
        // Predicated region
        $region29: #{cosine_similarity_fast.1} parent=27 // pred_check
          %p1380 = pneg %p97
        $region30: #{cosine_similarity_fast.1} parent=27 // pred_check_branch
          %1382 = sbr.rel (%p1380) target = $region32
        $region31: #{cosine_similarity_fast.1} parent=27 // pred_region
          %s1383 = smul.u32 25, %s17
          %s1384 = smul.u32 2, %s18
          %s1385 = smul.addr %s1383, 4
          %s1386 = sadd.s32 %s1384, %s1385
          %s1387 = smul.addr %s1386, 8
          %s1388 = scalar_lea.vmem %s2, %s1387
          // Predicated region
          $region33: #{cosine_similarity_fast.1} parent=31 // pred_check
            _
          $region34: #{cosine_similarity_fast.1} parent=31 // pred_check_branch
            %1390 = sbr.rel (0) target = $region36
          $region35: #{cosine_similarity_fast.1} parent=31 // pred_region
            // Predicated region
            $region37: #{cosine_similarity_fast.1} parent=35 // pred_check
              _
            $region38: #{cosine_similarity_fast.1} parent=35 // pred_check_branch
              %1392 = sbr.rel (0) target = $region40
            $region39: #{cosine_similarity_fast.1} parent=35 // pred_region
              loop: start=0, step=1, limit=1
              $region41: #{cosine_similarity_fast.1} parent=39 // loop_pre_header
                _
              $region42: #{cosine_similarity_fast.1} parent=39 // loop_header
                %s1394 = sphi 0, %s1398
                %p1395 = scmp.ge.s32.totalorder %s1394, 1
                %s1399 = sphi %s1379, %s1379
                %s1400 = sphi %s1388, %s1388
              $region43: #{cosine_similarity_fast.1} parent=39 // loop_header_branch
                %1397 = sbr.rel (%p1395) target = $region47
              $region44: #{cosine_similarity_fast.1} parent=39 // loop_body
                %v1401 = vld [vmem:[%s1399] sm:$0xff]
                %1402 = vst [vmem:[%s1400] sm:$0xff] %v1401
                %v1403 = vld [vmem:[%s1399 + $0x8] sm:$0xff]
                %1404 = vst [vmem:[%s1400 + $0x8] sm:$0xff] %v1403
                %v1405 = vld [vmem:[%s1399 + $0x10] sm:$0xff]
                %1406 = vst [vmem:[%s1400 + $0x20] sm:$0xff] %v1405
                %v1407 = vld [vmem:[%s1399 + $0x18] sm:$0xff]
                %1408 = vst [vmem:[%s1400 + $0x28] sm:$0xff] %v1407
                %v1409 = vld [vmem:[%s1399 + $0x20] sm:$0xff]
                %1410 = vst [vmem:[%s1400 + $0x40] sm:$0xff] %v1409
                %v1411 = vld [vmem:[%s1399 + $0x28] sm:$0xff]
                %1412 = vst [vmem:[%s1400 + $0x48] sm:$0xff] %v1411
                %v1413 = vld [vmem:[%s1399 + $0x30] sm:$0xff]
                %1414 = vst [vmem:[%s1400 + $0x60] sm:$0xff] %v1413
                %v1415 = vld [vmem:[%s1399 + $0x38] sm:$0xff]
                %1416 = vst [vmem:[%s1400 + $0x68] sm:$0xff] %v1415
                %v1417 = vld [vmem:[%s1399 + $0x40] sm:$0xff]
                %1418 = vst [vmem:[%s1400 + $0x80] sm:$0xff] %v1417
                %v1419 = vld [vmem:[%s1399 + $0x48] sm:$0xff]
                %1420 = vst [vmem:[%s1400 + $0x88] sm:$0xff] %v1419
                %v1421 = vld [vmem:[%s1399 + $0x50] sm:$0xff]
                %1422 = vst [vmem:[%s1400 + $0xa0] sm:$0xff] %v1421
                %v1423 = vld [vmem:[%s1399 + $0x58] sm:$0xff]
                %1424 = vst [vmem:[%s1400 + $0xa8] sm:$0xff] %v1423
                %v1425 = vld [vmem:[%s1399 + $0x60] sm:$0xff]
                %1426 = vst [vmem:[%s1400 + $0xc0] sm:$0xff] %v1425
                %v1427 = vld [vmem:[%s1399 + $0x68] sm:$0xff]
                %1428 = vst [vmem:[%s1400 + $0xc8] sm:$0xff] %v1427
                %v1429 = vld [vmem:[%s1399 + $0x70] sm:$0xff]
                %1430 = vst [vmem:[%s1400 + $0xe0] sm:$0xff] %v1429
                %v1431 = vld [vmem:[%s1399 + $0x78] sm:$0xff]
                %1432 = vst [vmem:[%s1400 + $0xe8] sm:$0xff] %v1431
                %v1433 = vld [vmem:[%s1399 + $0x80] sm:$0xff]
                %1434 = vst [vmem:[%s1400 + $0x100] sm:$0xff] %v1433
                %v1435 = vld [vmem:[%s1399 + $0x88] sm:$0xff]
                %1436 = vst [vmem:[%s1400 + $0x108] sm:$0xff] %v1435
                %v1437 = vld [vmem:[%s1399 + $0x90] sm:$0xff]
                %1438 = vst [vmem:[%s1400 + $0x120] sm:$0xff] %v1437
                %v1439 = vld [vmem:[%s1399 + $0x98] sm:$0xff]
                %1440 = vst [vmem:[%s1400 + $0x128] sm:$0xff] %v1439
                %v1441 = vld [vmem:[%s1399 + $0xa0] sm:$0xff]
                %1442 = vst [vmem:[%s1400 + $0x140] sm:$0xff] %v1441
                %v1443 = vld [vmem:[%s1399 + $0xa8] sm:$0xff]
                %1444 = vst [vmem:[%s1400 + $0x148] sm:$0xff] %v1443
                %v1445 = vld [vmem:[%s1399 + $0xb0] sm:$0xff]
                %1446 = vst [vmem:[%s1400 + $0x160] sm:$0xff] %v1445
                %v1447 = vld [vmem:[%s1399 + $0xb8] sm:$0xff]
                %1448 = vst [vmem:[%s1400 + $0x168] sm:$0xff] %v1447
                %v1449 = vld [vmem:[%s1399 + $0xc0] sm:$0xff]
                %1450 = vst [vmem:[%s1400 + $0x180] sm:$0xff] %v1449
                %v1451 = vld [vmem:[%s1399 + $0xc8] sm:$0xff]
                %1452 = vst [vmem:[%s1400 + $0x188] sm:$0xff] %v1451
                %v1453 = vld [vmem:[%s1399 + $0xd0] sm:$0xff]
                %1454 = vst [vmem:[%s1400 + $0x1a0] sm:$0xff] %v1453
                %v1455 = vld [vmem:[%s1399 + $0xd8] sm:$0xff]
                %1456 = vst [vmem:[%s1400 + $0x1a8] sm:$0xff] %v1455
                %v1457 = vld [vmem:[%s1399 + $0xe0] sm:$0xff]
                %1458 = vst [vmem:[%s1400 + $0x1c0] sm:$0xff] %v1457
                %v1459 = vld [vmem:[%s1399 + $0xe8] sm:$0xff]
                %1460 = vst [vmem:[%s1400 + $0x1c8] sm:$0xff] %v1459
                %v1461 = vld [vmem:[%s1399 + $0xf0] sm:$0xff]
                %1462 = vst [vmem:[%s1400 + $0x1e0] sm:$0xff] %v1461
                %v1463 = vld [vmem:[%s1399 + $0xf8] sm:$0xff]
                %1464 = vst [vmem:[%s1400 + $0x1e8] sm:$0xff] %v1463
                %v1465 = vld [vmem:[%s1399 + $0x100] sm:$0xff]
                %1466 = vst [vmem:[%s1400 + $0x200] sm:$0xff] %v1465
                %v1467 = vld [vmem:[%s1399 + $0x108] sm:$0xff]
                %1468 = vst [vmem:[%s1400 + $0x208] sm:$0xff] %v1467
                %v1469 = vld [vmem:[%s1399 + $0x110] sm:$0xff]
                %1470 = vst [vmem:[%s1400 + $0x220] sm:$0xff] %v1469
                %v1471 = vld [vmem:[%s1399 + $0x118] sm:$0xff]
                %1472 = vst [vmem:[%s1400 + $0x228] sm:$0xff] %v1471
                %v1473 = vld [vmem:[%s1399 + $0x120] sm:$0xff]
                %1474 = vst [vmem:[%s1400 + $0x240] sm:$0xff] %v1473
                %v1475 = vld [vmem:[%s1399 + $0x128] sm:$0xff]
                %1476 = vst [vmem:[%s1400 + $0x248] sm:$0xff] %v1475
                %v1477 = vld [vmem:[%s1399 + $0x130] sm:$0xff]
                %1478 = vst [vmem:[%s1400 + $0x260] sm:$0xff] %v1477
                %v1479 = vld [vmem:[%s1399 + $0x138] sm:$0xff]
                %1480 = vst [vmem:[%s1400 + $0x268] sm:$0xff] %v1479
                %v1481 = vld [vmem:[%s1399 + $0x140] sm:$0xff]
                %1482 = vst [vmem:[%s1400 + $0x280] sm:$0xff] %v1481
                %v1483 = vld [vmem:[%s1399 + $0x148] sm:$0xff]
                %1484 = vst [vmem:[%s1400 + $0x288] sm:$0xff] %v1483
                %v1485 = vld [vmem:[%s1399 + $0x150] sm:$0xff]
                %1486 = vst [vmem:[%s1400 + $0x2a0] sm:$0xff] %v1485
                %v1487 = vld [vmem:[%s1399 + $0x158] sm:$0xff]
                %1488 = vst [vmem:[%s1400 + $0x2a8] sm:$0xff] %v1487
                %v1489 = vld [vmem:[%s1399 + $0x160] sm:$0xff]
                %1490 = vst [vmem:[%s1400 + $0x2c0] sm:$0xff] %v1489
                %v1491 = vld [vmem:[%s1399 + $0x168] sm:$0xff]
                %1492 = vst [vmem:[%s1400 + $0x2c8] sm:$0xff] %v1491
                %v1493 = vld [vmem:[%s1399 + $0x170] sm:$0xff]
                %1494 = vst [vmem:[%s1400 + $0x2e0] sm:$0xff] %v1493
                %v1495 = vld [vmem:[%s1399 + $0x178] sm:$0xff]
                %1496 = vst [vmem:[%s1400 + $0x2e8] sm:$0xff] %v1495
                %v1497 = vld [vmem:[%s1399 + $0x180] sm:$0xff]
                %1498 = vst [vmem:[%s1400 + $0x300] sm:$0xff] %v1497
                %v1499 = vld [vmem:[%s1399 + $0x188] sm:$0xff]
                %1500 = vst [vmem:[%s1400 + $0x308] sm:$0xff] %v1499
              $region45: #{cosine_similarity_fast.1} parent=39 // loop_footer
                %s1398 = sadd.s32 1, %s1394
              $region46: #{cosine_similarity_fast.1} parent=39 // loop_footer_branch
                %1393 = sbr.rel target = $region42
              $region47: #{cosine_similarity_fast.1} parent=39 // loop_exit
                _
            $region40: #{cosine_similarity_fast.1} parent=35 // pred_fallthru
              _
            // Predicated region
            $region48: #{cosine_similarity_fast.1} parent=35 // pred_check
              _
            $region49: #{cosine_similarity_fast.1} parent=35 // pred_check_branch
              %1502 = sbr.rel target = $region51
            $region50: #{cosine_similarity_fast.1} parent=35 // pred_region
              _
            $region51: #{cosine_similarity_fast.1} parent=35 // pred_fallthru
              _
          $region36: #{cosine_similarity_fast.1} parent=31 // pred_fallthru
            _
          %1503 = vnop
        $region32: #{cosine_similarity_fast.1} parent=27 // pred_fallthru
          _
      $region28: #{cosine_similarity_fast.1} parent=5 // pred_fallthru
        _
      %p1504 = scmp.le.s32.totalorder 2, %s8
      // Predicated region
      $region52: #{cosine_similarity_fast.1} parent=5 // pred_check
        %p1505 = pneg %p1504
      $region53: #{cosine_similarity_fast.1} parent=5 // pred_check_branch
        %1507 = sbr.rel (%p1505) target = $region55
      $region54: #{cosine_similarity_fast.1} parent=5 // pred_region
        %s1508 = ssub.s32 %s8, 2
        // Predicated region
        $region56: #{cosine_similarity_fast.1} parent=54 // pred_check
          %p1509 = pneg %p103
        $region57: #{cosine_similarity_fast.1} parent=54 // pred_check_branch
          %1511 = sbr.rel (%p1509) target = $region59
        $region58: #{cosine_similarity_fast.1} parent=54 // pred_region
          %s1512 = sand.u32 %s88, 1
          %s1513 = sand.u32 %s88, 1
          %s1514 = smul.addr %s1513, 400
          %s1515 = scalar_lea.vmem [#allocation2], %s1514
        $region59: #{cosine_similarity_fast.1} parent=54 // pred_fallthru
          _
      $region55: #{cosine_similarity_fast.1} parent=5 // pred_fallthru
        _
    $region6: #{cosine_similarity_fast.1} parent=1 // loop_footer
      %s12 = sadd.s32 1, %s8
    $region7: #{cosine_similarity_fast.1} parent=1 // loop_footer_branch
      %7 = sbr.rel target = $region3
    $region8: #{cosine_similarity_fast.1} parent=1 // loop_exit
      _

</llo_original>
